<compile_context>
chip_gen: v5e
topology: v5e:2x2
jax: 0.10.0
libtpu: 0.0.40
codegen_flags: <defaults>
</compile_context>

<pallas_src>
import math

import jax
import jax.numpy as jnp
from jax import lax
from jax.experimental import pallas as pl
from jax.experimental.pallas import tpu as pltpu


def make_mtan_kernel(num_heads, embed_time_k, batch_block, out_dim,
                     compute_dtype, approx_recip):
    H, EK, BB, D = num_heads, embed_time_k, batch_block, out_dim
    dn_nt = (((1,), (1,)), ((), ()))     # contract EK of both operands (NT form)

    def kernel(q_ref, k_ref, v_ref, m_ref,
               wq_ref, bq_ref, wk_ref, bk_ref, wo_ref, bo_ref,
               o_ref, qp_s, kp_s):
        LQ = q_ref.shape[1]
        LK = k_ref.shape[1]
        E = q_ref.shape[2]

        # Fused q/k projections: ONE (BB*L, E) @ (E, E) matmul each.  The
        # 1/sqrt(EK) scale is already folded into wq/bq by the wrapper.
        # Results go to VMEM scratch so the batch loop below only holds one
        # iteration's intermediates live at a time.
        q2d = q_ref[...].reshape(BB * LQ, E)
        k2d = k_ref[...].reshape(BB * LK, E)
        qp_s[...] = (jnp.dot(q2d, wq_ref[...],
                             preferred_element_type=jnp.float32)
                     + bq_ref[...]).astype(compute_dtype)
        kp_s[...] = (jnp.dot(k2d, wk_ref[...],
                             preferred_element_type=jnp.float32)
                     + bk_ref[...]).astype(compute_dtype)

        def batch_body(b, carry):
            q_off = pl.multiple_of(b * LQ, LQ)
            k_off = pl.multiple_of(b * LK, LK)

            # Mask-derived matmul RHS built once per batch row:
            #   [mask * value | mask] -> (LK, 2D).   (mask assumed binary, as
            # in the reference where it only gates a -1e9 additive penalty.)
            v_b = v_ref[b]                                        # (LK, D) f32
            m_b = m_ref[b]                                        # (LK, D) f32
            rhs = jnp.concatenate([m_b * v_b, m_b],
                                  axis=-1).astype(compute_dtype)  # (LK, 2D)
            # Fully-masked feature columns: reference softmax degenerates to a
            # uniform average over keys.  One broadcast per batch row, shared
            # by every head.
            mean_b = jnp.sum(v_b, axis=0, keepdims=True) * (1.0 / LK)  # (1, D)
            fallback = jnp.broadcast_to(mean_b, (H * LQ, D))

            # Per-head scores stacked along sublanes -> (H*LQ, LK).
            scores = []
            for h in range(H):                       # H is small and static
                qh = qp_s[pl.ds(q_off, LQ), h * EK:(h + 1) * EK]   # (LQ, EK)
                kh = kp_s[pl.ds(k_off, LK), h * EK:(h + 1) * EK]   # (LK, EK)
                scores.append(lax.dot_general(
                    qh, kh, dn_nt, preferred_element_type=jnp.float32))
            s = jnp.concatenate(scores, axis=0)                    # (H*LQ, LK)

            # Masked softmax over keys as ONE matmul against [m*v | m].
            # NOTE: rowmax is over all keys (the reference masks with -1e9
            # before its implicit max); identical unless masked scores exceed
            # unmasked ones by ~88 (f32 exp underflow) -- documented gap.
            rowmax = jnp.max(s, axis=1, keepdims=True)
            e = jnp.exp(s - rowmax).astype(compute_dtype)          # (H*LQ, LK)
            nd = jnp.dot(e, rhs,
                         preferred_element_type=jnp.float32)       # (H*LQ, 2D)
            num = nd[:, :D]
            den = nd[:, D:]
            inv = pl.reciprocal(jnp.maximum(den, 1e-30), approx=approx_recip)
            out_stack = jnp.where(den > 0.0, num * inv, fallback)  # (H*LQ, D)

            # Output projection: accumulate per-head (LQ, D) @ (D, NHp) slabs
            # (sublane slices of out_stack) -- no lane-wise head concat.
            acc = jnp.dot(out_stack[0:LQ].astype(compute_dtype), wo_ref[0],
                          preferred_element_type=jnp.float32)
            for h in range(1, H):
                acc = acc + jnp.dot(
                    out_stack[h * LQ:(h + 1) * LQ].astype(compute_dtype),
                    wo_ref[h], preferred_element_type=jnp.float32)
            o_ref[b] = (acc + bo_ref[...]).astype(o_ref.dtype)
            return carry

        lax.fori_loop(0, BB, batch_body, 0)

    return kernel


def _round_up(x, m):
    return ((x + m - 1) // m) * m


def _vmem_limit_bytes():
    """Generation-aware VMEM scoped limit (v7x: 64 MiB physical/TC)."""
    cap = 128 * 1024 * 1024
    try:
        cap = int(getattr(pltpu.get_tpu_info(), "vmem_capacity_bytes", cap))
    except Exception:
        pass
    return int(min(max(cap // 2, 32 * 1024 * 1024), 96 * 1024 * 1024))


def _pick_batch_block(B, lq_steps, lq_block, fits, target_m=256):
    """Fold batch rows per grid step so projections see M >= target_m MXU rows,
    preferring >= 2 total grid steps (dual TensorCores on v7x), and never
    exceeding the VMEM budget (`fits`)."""
    divisors = [d for d in range(1, B + 1) if B % d == 0]
    for d in divisors:                       # smallest fold reaching target M
        if d * lq_block >= target_m and (B // d) * lq_steps >= 2 and fits(d):
            return d
    best = 1
    for d in divisors:                       # largest fold keeping >= 2 steps
        if (B // d) * lq_steps >= 2 and fits(d):
            best = d
    return best


def multi_time_attention(query, key, value, mask, params, num_heads,
                         *, batch_block=None, lq_block=None, use_bf16=False):
    """query: (B, Lq, E), key: (B, Lk, E), value: (B, Lk, D), mask: (B, Lk, D)."""
    B, Lq, E = query.shape
    _, Lk, D = value.shape
    NH = params["wo_t"].shape[1]
    H = num_heads
    assert E % H == 0
    EK = E // H

    compute_dtype = jnp.bfloat16 if use_bf16 else jnp.float32
    in_bytes = 2 if use_bf16 else 4

    # Only lane-pad the output when NH is large enough that unmasked stores
    # beat the extra HBM writeback (small NH: padding writes up to 8x bytes).
    if NH % 128 == 0 or NH < 64:
        NHp = NH
    else:
        NHp = _round_up(NH, 128)

    vmem_limit = _vmem_limit_bytes()

    if lq_block is None:
        lq_block = Lq
        if Lq > 256:                          # bound VMEM blocks (v7x: 64 MiB)
            for cand in (256, 128, 64, 32, 16, 8):
                if Lq % cand == 0:
                    lq_block = cand
                    break
    assert Lq % lq_block == 0
    lq_steps = Lq // lq_block

    def _fits(bb):
        blocks = ((bb * lq_block * E + bb * Lk * E) * in_bytes    # q, k
                  + 2 * bb * Lk * D * 4                           # value, mask
                  + bb * lq_block * NHp * 4)                      # output
        scratch = (bb * lq_block * E + bb * Lk * E) * in_bytes    # qp/kp scratch
        weights = (2 * E * E + H * D * NHp) * in_bytes + (2 * E + NHp) * 4
        return 2 * blocks + scratch + 2 * weights <= vmem_limit // 2

    if batch_block is None:
        batch_block = _pick_batch_block(B, lq_steps, lq_block, _fits)
    assert B % batch_block == 0

    # Fold the 1/sqrt(EK) score scale into the query projection parameters
    # (one-time constant rescale; removes the per-tile VPU multiply).
    scale = 1.0 / math.sqrt(EK)
    wq_s = (params["wq_t"] * scale).astype(compute_dtype)
    bq_s = (params["bq"] * scale).astype(jnp.float32)
    wk_s = params["wk_t"].astype(compute_dtype)
    bk_s = params["bk"].astype(jnp.float32)

    # Per-head Wo slabs (H, D, NHp): heads are contiguous D-wide row blocks of
    # the (H*D, NH) output weight; the kernel accumulates per head.
    wo_h = params["wo_t"].reshape(H, D, NH)
    if NHp != NH:
        wo_h = jnp.zeros((H, D, NHp), jnp.float32).at[:, :, :NH].set(wo_h)
        bo_p = jnp.zeros((1, NHp), jnp.float32).at[:, :NH].set(params["bo"])
    else:
        bo_p = params["bo"]
    wo_h = wo_h.astype(compute_dtype)
    bo_p = bo_p.astype(jnp.float32)

    q_in = query.astype(compute_dtype)
    k_in = key.astype(compute_dtype)
    v_in = value.astype(jnp.float32)      # mask / softmax math stays f32
    m_in = mask.astype(jnp.float32)

    kernel = make_mtan_kernel(H, EK, batch_block, D, compute_dtype,
                              approx_recip=use_bf16)

    grid = (B // batch_block, lq_steps)   # lq innermost: k/v/mask blocks reused

    grid_spec = pltpu.PrefetchScalarGridSpec(
        num_scalar_prefetch=0,
        grid=grid,
        in_specs=[
            pl.BlockSpec((batch_block, lq_block, E), lambda b, q: (b, q, 0)),  # query
            pl.BlockSpec((batch_block, Lk, E), lambda b, q: (b, 0, 0)),        # key
            pl.BlockSpec((batch_block, Lk, D), lambda b, q: (b, 0, 0)),        # value
            pl.BlockSpec((batch_block, Lk, D), lambda b, q: (b, 0, 0)),        # mask
            pl.BlockSpec((E, E), lambda b, q: (0, 0)),                         # Wq (scaled)
            pl.BlockSpec((1, E), lambda b, q: (0, 0)),                         # bq (scaled)
            pl.BlockSpec((E, E), lambda b, q: (0, 0)),                         # Wk
            pl.BlockSpec((1, E), lambda b, q: (0, 0)),                         # bk
            pl.BlockSpec((H, D, NHp), lambda b, q: (0, 0, 0)),                 # Wo slabs
            pl.BlockSpec((1, NHp), lambda b, q: (0, 0)),                       # bo
        ],
        out_specs=pl.BlockSpec((batch_block, lq_block, NHp),
                               lambda b, q: (b, q, 0)),
        scratch_shapes=[
            pltpu.VMEM((batch_block * lq_block, E), compute_dtype),  # projected q
            pltpu.VMEM((batch_block * Lk, E), compute_dtype),        # projected k
        ],
    )

    # Advisory cost estimate for XLA scheduling around the custom call.
    steps = grid[0] * grid[1]
    flops_step = (2 * batch_block * lq_block * E * E
                  + 2 * batch_block * Lk * E * E
                  + 2 * batch_block * H * lq_block * Lk * EK
                  + 2 * batch_block * H * lq_block * Lk * (2 * D)
                  + 2 * batch_block * H * lq_block * D * NHp)
    nbytes = lambda a: a.size * a.dtype.itemsize
    cost = pl.CostEstimate(
        flops=int(steps * flops_step),
        transcendentals=int(B * H * Lq * Lk),
        bytes_accessed=int(nbytes(q_in) + nbytes(k_in) + nbytes(v_in)
                           + nbytes(m_in) + B * Lq * NHp * 4
                           + steps * (nbytes(wq_s) + nbytes(wk_s) + nbytes(wo_h)
                                      + nbytes(bq_s) + nbytes(bk_s)
                                      + nbytes(bo_p))))

    out = pl.pallas_call(
        kernel,
        out_shape=jax.ShapeDtypeStruct((B, Lq, NHp), jnp.float32),
        grid_spec=grid_spec,
        compiler_params=pltpu.CompilerParams(
            dimension_semantics=("parallel", "parallel"),
            vmem_limit_bytes=vmem_limit),
        cost_estimate=cost,
    )(q_in, k_in, v_in, m_in, wq_s, bq_s, wk_s, bk_s, wo_h, bo_p)

    if NHp != NH:
        out = out[..., :NH]
    return out


def multi_time_attention_ref(query, key, value, mask, params, num_heads):
    """Pure-JAX reference mirroring the PyTorch forward exactly."""
    B, Lq, E = query.shape
    _, Lk, D = value.shape
    EK = E // num_heads

    qp = query @ params["wq_t"] + params["bq"]
    kp = key @ params["wk_t"] + params["bk"]
    qh = qp.reshape(B, Lq, num_heads, EK).transpose(0, 2, 1, 3)   # (B,H,Lq,EK)
    kh = kp.reshape(B, Lk, num_heads, EK).transpose(0, 2, 1, 3)   # (B,H,Lk,EK)

    scores = jnp.einsum("bhqe,bhke->bhqk", qh, kh) / math.sqrt(EK)
    scores = jnp.broadcast_to(scores[..., None], (B, num_heads, Lq, Lk, D))
    m = mask[:, None, None, :, :]                                  # (B,1,1,Lk,D)
    scores = jnp.where(m == 0, -1e9, scores)
    p = jax.nn.softmax(scores, axis=-2)
    out = jnp.sum(p * value[:, None, None, :, :], axis=-2)         # (B,H,Lq,D)
    x = out.transpose(0, 2, 1, 3).reshape(B, Lq, num_heads * D)
    return x @ params["wo_t"] + params["bo"]


if __name__ == "__main__":
    # small shapes consistent with the module
    B, Lq, Lk = 2, 8, 8
    input_dim, nhidden, embed_time, num_heads = 4, 16, 16, 2

    key0 = jax.random.PRNGKey(0)
    ks = jax.random.split(key0, 10)

    query = jax.random.normal(ks[0], (B, Lq, embed_time), jnp.float32)
    key_t = jax.random.normal(ks[1], (B, Lk, embed_time), jnp.float32)
    value = jax.random.normal(ks[2], (B, Lk, input_dim), jnp.float32)
    mask = (jax.random.uniform(ks[3], (B, Lk, input_dim)) > 0.3).astype(jnp.float32)

    # deterministic synthetic parameters (Linear weights stored pre-transposed: (in, out))
    params = {
        "wq_t": 0.1 * jax.random.normal(ks[4], (embed_time, embed_time), jnp.float32),
        "bq": 0.1 * jax.random.normal(ks[5], (1, embed_time), jnp.float32),
        "wk_t": 0.1 * jax.random.normal(ks[6], (embed_time, embed_time), jnp.float32),
        "bk": 0.1 * jax.random.normal(ks[7], (1, embed_time), jnp.float32),
        "wo_t": 0.1 * jax.random.normal(ks[8], (num_heads * input_dim, nhidden), jnp.float32),
        "bo": 0.1 * jax.random.normal(ks[9], (1, nhidden), jnp.float32),
    }

    ref = multi_time_attention_ref(query, key_t, value, mask, params, num_heads)

    # f32 matmul path (v5e-friendly, exact divide) — tight check.
    out_f32 = multi_time_attention(query, key_t, value, mask, params, num_heads,
                                   use_bf16=False)
    out_f32 = jax.block_until_ready(out_f32)
    assert out_f32.shape == (B, Lq, nhidden)
    assert jnp.allclose(out_f32, ref, atol=5e-3, rtol=5e-3), "f32 kernel mismatch"

    # bf16 matmul-input path (v6e/v7x), f32 accumulation — looser check.
    out_bf16 = multi_time_attention(query, key_t, value, mask, params, num_heads,
                                    use_bf16=True)
    out_bf16 = jax.block_until_ready(out_bf16)
    assert out_bf16.shape == (B, Lq, nhidden)
    assert jnp.allclose(out_bf16, ref, atol=5e-2, rtol=5e-2), "bf16 kernel mismatch"

    print("KERNEL_OK")
</pallas_src>

<mosaic_0001>
module attributes {stable_mosaic.version = 11 : i64} {
  func.func @kernel(%arg0: i32, %arg1: i32, %arg2: memref<1x8x16xf32, #tpu.memory_space<vmem>>, %arg3: memref<1x8x16xf32, #tpu.memory_space<vmem>>, %arg4: memref<1x8x4xf32, #tpu.memory_space<vmem>>, %arg5: memref<1x8x4xf32, #tpu.memory_space<vmem>>, %arg6: memref<16x16xf32, #tpu.memory_space<vmem>>, %arg7: memref<1x16xf32, #tpu.memory_space<vmem>>, %arg8: memref<16x16xf32, #tpu.memory_space<vmem>>, %arg9: memref<1x16xf32, #tpu.memory_space<vmem>>, %arg10: memref<2x4x16xf32, #tpu.memory_space<vmem>>, %arg11: memref<1x16xf32, #tpu.memory_space<vmem>>, %arg12: memref<1x8x16xf32, #tpu.memory_space<vmem>>, %arg13: memref<8x16xf32, #tpu.memory_space<vmem>>, %arg14: memref<8x16xf32, #tpu.memory_space<vmem>>) attributes {dimension_semantics = [#tpu.dimension_semantics<parallel>, #tpu.dimension_semantics<parallel>], iteration_bounds = array<i64: 2, 1>, scalar_prefetch = 0 : i64, scratch_operands = 2 : i64, tpu.core_type = #tpu.core_type<tc>, window_params = [{transform_indices = @transform_0, window_bounds = array<i64: 1, 8, 16>}, {transform_indices = @transform_1, window_bounds = array<i64: 1, 8, 16>}, {transform_indices = @transform_2, window_bounds = array<i64: 1, 8, 4>}, {transform_indices = @transform_3, window_bounds = array<i64: 1, 8, 4>}, {pipeline_mode = #tpu.pipeline_mode<synchronous>, transform_indices = @transform_4, window_bounds = array<i64: 16, 16>}, {pipeline_mode = #tpu.pipeline_mode<synchronous>, transform_indices = @transform_5, window_bounds = array<i64: 1, 16>}, {pipeline_mode = #tpu.pipeline_mode<synchronous>, transform_indices = @transform_6, window_bounds = array<i64: 16, 16>}, {pipeline_mode = #tpu.pipeline_mode<synchronous>, transform_indices = @transform_7, window_bounds = array<i64: 1, 16>}, {pipeline_mode = #tpu.pipeline_mode<synchronous>, transform_indices = @transform_8, window_bounds = array<i64: 2, 4, 16>}, {pipeline_mode = #tpu.pipeline_mode<synchronous>, transform_indices = @transform_9, window_bounds = array<i64: 1, 16>}, {transform_indices = @transform_10, window_bounds = array<i64: 1, 8, 16>}]} {
    %c0 = arith.constant 0 : index
    %c0_0 = arith.constant 0 : index
    %c0_1 = arith.constant 0 : index
    %0 = vector.load %arg2[%c0, %c0_0, %c0_1] : memref<1x8x16xf32, #tpu.memory_space<vmem>>, vector<1x8x16xf32>
    %1 = vector.shape_cast %0 : vector<1x8x16xf32> to vector<8x16xf32>
    %c0_2 = arith.constant 0 : index
    %c0_3 = arith.constant 0 : index
    %c0_4 = arith.constant 0 : index
    %2 = vector.load %arg3[%c0_2, %c0_3, %c0_4] : memref<1x8x16xf32, #tpu.memory_space<vmem>>, vector<1x8x16xf32>
    %3 = vector.shape_cast %2 : vector<1x8x16xf32> to vector<8x16xf32>
    %c0_5 = arith.constant 0 : index
    %c0_6 = arith.constant 0 : index
    %4 = vector.load %arg6[%c0_5, %c0_6] : memref<16x16xf32, #tpu.memory_space<vmem>>, vector<16x16xf32>
    %cst = arith.constant dense<0.000000e+00> : vector<8x16xf32>
    %5 = tpu.matmul %1, %4, %cst {dimension_numbers = #tpu.dot_dimension_numbers<[1], [0], [0], [1], [0, 0, 1, 1], [], []>} : vector<8x16xf32>, vector<16x16xf32>, vector<8x16xf32> -> vector<8x16xf32>
    %c0_7 = arith.constant 0 : index
    %c0_8 = arith.constant 0 : index
    %6 = vector.load %arg7[%c0_7, %c0_8] : memref<1x16xf32, #tpu.memory_space<vmem>>, vector<1x16xf32>
    %7 = vector.broadcast %6 : vector<1x16xf32> to vector<8x16xf32>
    %8 = arith.addf %5, %7 : vector<8x16xf32>
    %c0_9 = arith.constant 0 : index
    %c0_10 = arith.constant 0 : index
    %9 = vector.load %arg13[%c0_9, %c0_10] : memref<8x16xf32, #tpu.memory_space<vmem>>, vector<8x16xf32>
    tpu.vector_store %arg13[%c0_9, %c0_10], %8 {strides = array<i32>} : memref<8x16xf32, #tpu.memory_space<vmem>>, vector<8x16xf32>,
    %c0_11 = arith.constant 0 : index
    %c0_12 = arith.constant 0 : index
    %10 = vector.load %arg8[%c0_11, %c0_12] : memref<16x16xf32, #tpu.memory_space<vmem>>, vector<16x16xf32>
    %cst_13 = arith.constant dense<0.000000e+00> : vector<8x16xf32>
    %11 = tpu.matmul %3, %10, %cst_13 {dimension_numbers = #tpu.dot_dimension_numbers<[1], [0], [0], [1], [0, 0, 1, 1], [], []>} : vector<8x16xf32>, vector<16x16xf32>, vector<8x16xf32> -> vector<8x16xf32>
    %c0_14 = arith.constant 0 : index
    %c0_15 = arith.constant 0 : index
    %12 = vector.load %arg9[%c0_14, %c0_15] : memref<1x16xf32, #tpu.memory_space<vmem>>, vector<1x16xf32>
    %13 = vector.broadcast %12 : vector<1x16xf32> to vector<8x16xf32>
    %14 = arith.addf %11, %13 : vector<8x16xf32>
    %c0_16 = arith.constant 0 : index
    %c0_17 = arith.constant 0 : index
    %15 = vector.load %arg14[%c0_16, %c0_17] : memref<8x16xf32, #tpu.memory_space<vmem>>, vector<8x16xf32>
    tpu.vector_store %arg14[%c0_16, %c0_17], %14 {strides = array<i32>} : memref<8x16xf32, #tpu.memory_space<vmem>>, vector<8x16xf32>,
    %c0_i32 = arith.constant 0 : i32
    %c8_i32 = arith.constant 8 : i32
    %16 = arith.muli %c0_i32, %c8_i32 : i32
    %17 = tpu.assume_multiple %16, 8 : i32
    %c8_i32_18 = arith.constant 8 : i32
    %18 = arith.muli %c0_i32, %c8_i32_18 : i32
    %19 = tpu.assume_multiple %18, 8 : i32
    %20 = arith.index_cast %c0_i32 : i32 to index
    %c0_19 = arith.constant 0 : index
    %c0_20 = arith.constant 0 : index
    %21 = vector.load %arg4[%20, %c0_19, %c0_20] : memref<1x8x4xf32, #tpu.memory_space<vmem>>, vector<1x8x4xf32>
    %22 = vector.shape_cast %21 : vector<1x8x4xf32> to vector<8x4xf32>
    %23 = arith.index_cast %c0_i32 : i32 to index
    %c0_21 = arith.constant 0 : index
    %c0_22 = arith.constant 0 : index
    %24 = vector.load %arg5[%23, %c0_21, %c0_22] : memref<1x8x4xf32, #tpu.memory_space<vmem>>, vector<1x8x4xf32>
    %25 = vector.shape_cast %24 : vector<1x8x4xf32> to vector<8x4xf32>
    %26 = arith.mulf %25, %22 : vector<8x4xf32>
    %27 = tpu.concatenate %26, %25 in 1 : vector<8x4xf32>, vector<8x4xf32> -> vector<8x8xf32>
    %cst_23 = arith.constant dense<0.000000e+00> : vector<4xf32>
    %28 = vector.multi_reduction <add>, %22, %cst_23 [0] : vector<8x4xf32> to vector<4xf32>
    %29 = vector.shape_cast %28 : vector<4xf32> to vector<1x4xf32>
    %cst_24 = arith.constant 1.250000e-01 : f32
    %30 = vector.broadcast %cst_24 : f32 to vector<1x4xf32>
    %31 = arith.mulf %29, %30 : vector<1x4xf32>
    %32 = vector.shape_cast %31 : vector<1x4xf32> to vector<1x4xf32>
    %33 = vector.broadcast %32 : vector<1x4xf32> to vector<16x4xf32>
    %34 = arith.index_cast %17 : i32 to index
    %c0_25 = arith.constant 0 : index
    %35 = vector.load %arg13[%34, %c0_25] : memref<8x16xf32, #tpu.memory_space<vmem>>, vector<8x8xf32>
    %36 = arith.index_cast %19 : i32 to index
    %c0_26 = arith.constant 0 : index
    %37 = vector.load %arg14[%36, %c0_26] : memref<8x16xf32, #tpu.memory_space<vmem>>, vector<8x8xf32>
    %cst_27 = arith.constant dense<0.000000e+00> : vector<8x8xf32>
    %38 = tpu.matmul %35, %37, %cst_27 {dimension_numbers = #tpu.dot_dimension_numbers<[1], [1], [0], [0], [0, 0, 1, 0], [], []>} : vector<8x8xf32>, vector<8x8xf32>, vector<8x8xf32> -> vector<8x8xf32>
    %39 = arith.index_cast %17 : i32 to index
    %c8 = arith.constant 8 : index
    %40 = vector.load %arg13[%39, %c8] : memref<8x16xf32, #tpu.memory_space<vmem>>, vector<8x8xf32>
    %41 = arith.index_cast %19 : i32 to index
    %c8_28 = arith.constant 8 : index
    %42 = vector.load %arg14[%41, %c8_28] : memref<8x16xf32, #tpu.memory_space<vmem>>, vector<8x8xf32>
    %cst_29 = arith.constant dense<0.000000e+00> : vector<8x8xf32>
    %43 = tpu.matmul %40, %42, %cst_29 {dimension_numbers = #tpu.dot_dimension_numbers<[1], [1], [0], [0], [0, 0, 1, 0], [], []>} : vector<8x8xf32>, vector<8x8xf32>, vector<8x8xf32> -> vector<8x8xf32>
    %44 = tpu.concatenate %38, %43 in 0 : vector<8x8xf32>, vector<8x8xf32> -> vector<16x8xf32>
    %cst_30 = arith.constant dense<0xFF800000> : vector<16xf32>
    %45 = vector.multi_reduction <maximumf>, %44, %cst_30 [1] : vector<16x8xf32> to vector<16xf32>
    %46 = vector.shape_cast %45 : vector<16xf32> to vector<16x1xf32>
    %47 = vector.broadcast %46 : vector<16x1xf32> to vector<16x8xf32>
    %48 = arith.subf %44, %47 : vector<16x8xf32>
    %49 = math.exp %48 : vector<16x8xf32>
    %cst_31 = arith.constant dense<0.000000e+00> : vector<16x8xf32>
    %50 = tpu.matmul %49, %27, %cst_31 {dimension_numbers = #tpu.dot_dimension_numbers<[1], [0], [0], [1], [0, 0, 1, 1], [], []>} : vector<16x8xf32>, vector<8x8xf32>, vector<16x8xf32> -> vector<16x8xf32>
    %51 = vector.extract_strided_slice %50 {offsets = [0, 0], sizes = [16, 4], strides = [1, 1]} : vector<16x8xf32> to vector<16x4xf32>
    %52 = vector.extract_strided_slice %50 {offsets = [0, 4], sizes = [16, 4], strides = [1, 1]} : vector<16x8xf32> to vector<16x4xf32>
    %cst_32 = arith.constant 1.000000e-30 : f32
    %53 = vector.broadcast %cst_32 : f32 to vector<16x4xf32>
    %54 = arith.maximumf %52, %53 : vector<16x4xf32>
    %55 = tpu.reciprocal %54 : vector<16x4xf32> -> vector<16x4xf32>
    %cst_33 = arith.constant 0.000000e+00 : f32
    %56 = vector.broadcast %cst_33 : f32 to vector<16x4xf32>
    %57 = arith.cmpf ogt, %52, %56 : vector<16x4xf32>
    %58 = arith.mulf %51, %55 : vector<16x4xf32>
    %59 = arith.select %57, %58, %33 : vector<16x4xi1>, vector<16x4xf32>
    %60 = vector.extract_strided_slice %59 {offsets = [0, 0], sizes = [8, 4], strides = [1, 1]} : vector<16x4xf32> to vector<8x4xf32>
    %c0_34 = arith.constant 0 : index
    %c0_35 = arith.constant 0 : index
    %c0_36 = arith.constant 0 : index
    %61 = vector.load %arg10[%c0_34, %c0_35, %c0_36] : memref<2x4x16xf32, #tpu.memory_space<vmem>>, vector<1x4x16xf32>
    %62 = vector.shape_cast %61 : vector<1x4x16xf32> to vector<4x16xf32>
    %cst_37 = arith.constant dense<0.000000e+00> : vector<8x16xf32>
    %63 = tpu.matmul %60, %62, %cst_37 {dimension_numbers = #tpu.dot_dimension_numbers<[1], [0], [0], [1], [0, 0, 1, 1], [], []>} : vector<8x4xf32>, vector<4x16xf32>, vector<8x16xf32> -> vector<8x16xf32>
    %64 = vector.extract_strided_slice %59 {offsets = [8, 0], sizes = [8, 4], strides = [1, 1]} : vector<16x4xf32> to vector<8x4xf32>
    %c1 = arith.constant 1 : index
    %c0_38 = arith.constant 0 : index
    %c0_39 = arith.constant 0 : index
    %65 = vector.load %arg10[%c1, %c0_38, %c0_39] : memref<2x4x16xf32, #tpu.memory_space<vmem>>, vector<1x4x16xf32>
    %66 = vector.shape_cast %65 : vector<1x4x16xf32> to vector<4x16xf32>
    %cst_40 = arith.constant dense<0.000000e+00> : vector<8x16xf32>
    %67 = tpu.matmul %64, %66, %cst_40 {dimension_numbers = #tpu.dot_dimension_numbers<[1], [0], [0], [1], [0, 0, 1, 1], [], []>} : vector<8x4xf32>, vector<4x16xf32>, vector<8x16xf32> -> vector<8x16xf32>
    %68 = arith.addf %63, %67 : vector<8x16xf32>
    %c0_41 = arith.constant 0 : index
    %c0_42 = arith.constant 0 : index
    %69 = vector.load %arg11[%c0_41, %c0_42] : memref<1x16xf32, #tpu.memory_space<vmem>>, vector<1x16xf32>
    %70 = vector.broadcast %69 : vector<1x16xf32> to vector<8x16xf32>
    %71 = arith.addf %68, %70 : vector<8x16xf32>
    %72 = arith.index_cast %c0_i32 : i32 to index
    %c0_43 = arith.constant 0 : index
    %c0_44 = arith.constant 0 : index
    %73 = vector.load %arg12[%72, %c0_43, %c0_44] : memref<1x8x16xf32, #tpu.memory_space<vmem>>, vector<1x8x16xf32>
    %74 = vector.shape_cast %73 : vector<1x8x16xf32> to vector<8x16xf32>
    %75 = vector.shape_cast %71 : vector<8x16xf32> to vector<1x8x16xf32>
    tpu.vector_store %arg12[%72, %c0_43, %c0_44], %75 {strides = array<i32>} : memref<1x8x16xf32, #tpu.memory_space<vmem>>, vector<1x8x16xf32>,
    %c1_i32 = arith.constant 1 : i32
    return
  }
  func.func @transform_0(%arg0: i32, %arg1: i32) -> (i32, i32, i32) {
    %c0_i32 = arith.constant 0 : i32
    %c0_i32_0 = arith.constant 0 : i32
    return %arg0, %arg1, %c0_i32 : i32, i32, i32
  }
  func.func @transform_1(%arg0: i32, %arg1: i32) -> (i32, i32, i32) {
    %c0_i32 = arith.constant 0 : i32
    %c0_i32_0 = arith.constant 0 : i32
    %c0_i32_1 = arith.constant 0 : i32
    return %arg0, %c0_i32, %c0_i32_0 : i32, i32, i32
  }
  func.func @transform_2(%arg0: i32, %arg1: i32) -> (i32, i32, i32) {
    %c0_i32 = arith.constant 0 : i32
    %c0_i32_0 = arith.constant 0 : i32
    %c0_i32_1 = arith.constant 0 : i32
    return %arg0, %c0_i32, %c0_i32_0 : i32, i32, i32
  }
  func.func @transform_3(%arg0: i32, %arg1: i32) -> (i32, i32, i32) {
    %c0_i32 = arith.constant 0 : i32
    %c0_i32_0 = arith.constant 0 : i32
    %c0_i32_1 = arith.constant 0 : i32
    return %arg0, %c0_i32, %c0_i32_0 : i32, i32, i32
  }
  func.func @transform_4(%arg0: i32, %arg1: i32) -> (i32, i32) {
    %c0_i32 = arith.constant 0 : i32
    %c0_i32_0 = arith.constant 0 : i32
    %c0_i32_1 = arith.constant 0 : i32
    return %c0_i32, %c0_i32_0 : i32, i32
  }
  func.func @transform_5(%arg0: i32, %arg1: i32) -> (i32, i32) {
    %c0_i32 = arith.constant 0 : i32
    %c0_i32_0 = arith.constant 0 : i32
    %c0_i32_1 = arith.constant 0 : i32
    return %c0_i32, %c0_i32_0 : i32, i32
  }
  func.func @transform_6(%arg0: i32, %arg1: i32) -> (i32, i32) {
    %c0_i32 = arith.constant 0 : i32
    %c0_i32_0 = arith.constant 0 : i32
    %c0_i32_1 = arith.constant 0 : i32
    return %c0_i32, %c0_i32_0 : i32, i32
  }
  func.func @transform_7(%arg0: i32, %arg1: i32) -> (i32, i32) {
    %c0_i32 = arith.constant 0 : i32
    %c0_i32_0 = arith.constant 0 : i32
    %c0_i32_1 = arith.constant 0 : i32
    return %c0_i32, %c0_i32_0 : i32, i32
  }
  func.func @transform_8(%arg0: i32, %arg1: i32) -> (i32, i32, i32) {
    %c0_i32 = arith.constant 0 : i32
    %c0_i32_0 = arith.constant 0 : i32
    %c0_i32_1 = arith.constant 0 : i32
    %c0_i32_2 = arith.constant 0 : i32
    return %c0_i32, %c0_i32_0, %c0_i32_1 : i32, i32, i32
  }
  func.func @transform_9(%arg0: i32, %arg1: i32) -> (i32, i32) {
    %c0_i32 = arith.constant 0 : i32
    %c0_i32_0 = arith.constant 0 : i32
    %c0_i32_1 = arith.constant 0 : i32
    return %c0_i32, %c0_i32_0 : i32, i32
  }
  func.func @transform_10(%arg0: i32, %arg1: i32) -> (i32, i32, i32) {
    %c0_i32 = arith.constant 0 : i32
    %c0_i32_0 = arith.constant 0 : i32
    return %arg0, %arg1, %c0_i32 : i32, i32, i32
  }
}

</mosaic_0001>

<llo_original>
// kernel: tpu_custom_call.1
$region0: #{tpu_custom_call.1}
  #allocation0 [shape = 'u32[]', space=smem, size = 0x4, offset = 0x4, fixed_abs, tag = 'smem constant byte address 0x4 - core index']
  #allocation1 [shape = 'u32[72,128]{1,0:T(1,128)}', space=vmem, size = 0x9000, scoped, tag = 'internal scratch']
  #allocation2 [shape = 'f32[8,16]{1,0:T(8,128)}', space=vmem, size = 0x1000, scoped, tag = 'scratch operand']
  #allocation3 [shape = 'f32[8,16]{1,0:T(8,128)}', space=vmem, size = 0x1000, scoped, tag = 'scratch operand']
  %s0 = inlined_call_operand.vmem [shape: f32[2,8,16], index: 0, kind: input, shape index: {}]
  %s1 = inlined_call_operand.vmem [shape: f32[2,8,16], index: 1, kind: input, shape index: {}]
  %s2 = inlined_call_operand.vmem [shape: f32[2,8,4], index: 2, kind: input, shape index: {}]
  %s3 = inlined_call_operand.vmem [shape: f32[2,8,4], index: 3, kind: input, shape index: {}]
  %s4 = inlined_call_operand.vmem [shape: f32[16,16], index: 4, kind: input, shape index: {}]
  %s5 = inlined_call_operand.vmem [shape: f32[1,16], index: 5, kind: input, shape index: {}]
  %s6 = inlined_call_operand.hbm [shape: f32[16,16], index: 6, kind: input, shape index: {}]
  %s7 = inlined_call_operand.vmem [shape: f32[1,16], index: 7, kind: input, shape index: {}]
  %s8 = inlined_call_operand.hbm [shape: f32[2,4,16], index: 8, kind: input, shape index: {}]
  %s9 = inlined_call_operand.vmem [shape: f32[1,16], index: 9, kind: input, shape index: {}]
  %s10 = inlined_call_operand.hbm [shape: f32[2,8,16], index: 10, kind: output, shape index: {}]
  %s11 = sld [smem:[#allocation0]]
  $region81: #{tpu_custom_call.1} parent=0
    _
  %s13 = ssub.s32 1, %s11
  %s14 = scalar_select 0, %s13, %s11
  $region1: #{tpu_custom_call.1} parent=0
    #allocation4 [shape = 'u8[8192]{0}', space=vmem, size = 0x2000, scoped, tag = 'input window, operand 6, single buffered']
    #allocation5 [shape = 's32[2]{0}', space=sflag, size = 0x8, scoped, tag = 'scoped memory for tpu_custom_call.1']
    #allocation6 [shape = 's32[2]{0}', space=sflag, size = 0x8, scoped, tag = 'scoped memory for tpu_custom_call.1']
    #allocation7 [shape = 'u8[4096]{0}', space=vmem, size = 0x1000, scoped, tag = 'input window, operand 8, single buffered']
    #allocation8 [shape = 's32[1]{0}', space=sflag, size = 0x4, scoped, tag = 'scoped memory for tpu_custom_call.1']
    #allocation9 [shape = 'u8[8192]{0}', space=vmem, size = 0x2000, scoped, tag = 'output window, operand 0']
    %15 = vsyncpa [#allocation5], 0
    %16 = vsyncpa [#allocation8], 0
    %17 = vsyncpa [#allocation6], 0
    %s18 = scalar_lea.sflag [#allocation6], 1
    %19 = vsyncpa %s18, 0
    loop: start=0, step=1, limit=4
    $region2: #{tpu_custom_call.1} parent=1 // loop_pre_header
      _
    $region3: #{tpu_custom_call.1} parent=1 // loop_header
      %s21 = sphi 0, %s25
      %p22 = scmp.ge.s32.totalorder %s21, 4
      %s28 = sphi 0, %s40
      %s29 = sphi 0, %s36
      %s30 = sphi 0, %s28
      %s31 = sphi 0, %s29
      %s32 = sphi 0, %s30
      %s33 = sphi 0, %s31
      %s45 = sphi 0, %s47
      %s48 = sphi 0, %s45
      %s49 = sphi 0, %s48
      %s65 = sphi 0, %s49
      %s71 = sphi 0, %s73
      %s74 = sphi 0, %s71
      %s75 = sphi 0, %s74
      %s91 = sphi 0, %s75
      %s97 = sphi 0, %s99
      %s100 = sphi 0, %s97
      %s101 = sphi 0, %s100
      %s117 = sphi 0, %s101
      %s123 = sphi 0, %s125
      %s126 = sphi 0, %s123
      %s127 = sphi 0, %s126
      %s143 = sphi 0, %s127
      %s147 = sphi 0, %s147
      %s149 = sphi 0, %s147
      %s150 = sphi 0, %s149
      %s164 = sphi 0, %s150
      %s168 = sphi 0, %s168
      %s170 = sphi 0, %s168
      %s171 = sphi 0, %s170
      %s185 = sphi 0, %s171
      %s189 = sphi 0, %s189
      %s191 = sphi 0, %s189
      %s192 = sphi 0, %s191
      %s206 = sphi 0, %s192
      %s210 = sphi 0, %s210
      %s212 = sphi 0, %s210
      %s213 = sphi 0, %s212
      %s227 = sphi 0, %s213
      %s231 = sphi 0, %s231
      %s233 = sphi 0, %s231
      %s234 = sphi 0, %s233
      %s248 = sphi 0, %s234
      %s252 = sphi 0, %s252
      %s254 = sphi 0, %s252
      %s255 = sphi 0, %s254
      %s269 = sphi 0, %s255
      %s277 = sphi 0, %s279
      %s280 = sphi 0, %s277
      %s281 = sphi 0, %s280
      %s297 = sphi 0, %s281
    $region4: #{tpu_custom_call.1} parent=1 // loop_header_branch
      %24 = sbr.rel (%p22) target = $region8
    $region5: #{tpu_custom_call.1} parent=1 // loop_body
      %s26 = ssub.s32 %s21, 1
      %s27 = ssub.s32 %s21, 2
      %s34 = sadd.s32 1, %s29
      %p35 = scmp.ge.s32.totalorder %s34, 1
      %s36 = scalar_select %p35, 0, %s34
      %s37 = sadd.s32 1, %s28
      %s38 = scalar_select %p35, %s37, %s28
      %p39 = scmp.ge.s32.totalorder %s38, 2
      %s40 = scalar_select %p39, 0, %s38
      %s41 = ssub.s32 %s28, %s40
      %s42 = ssub.s32 %s29, %s36
      %s43 = sor.u32 %s41, %s42
      %p44 = scmp.eq.s32.totalorder %s43, 0
      %s46 = sadd.s32 %s45, 1
      %s47 = scalar_select %p44, %s45, %s46
      %p50 = pneg %p44
      %p51 = scmp.eq.s32.totalorder %s21, 1
      %p52 = por %p50, %p51
      %p53 = scmp.ne.s32.totalorder %s45, %s48
      %p54 = scmp.eq.s32.totalorder %s21, 0
      %p55 = por %p53, %p54
      %p56 = scmp.ne.s32.totalorder %s45, %s48
      %p57 = scmp.eq.s32.totalorder %s26, 1
      %p58 = por %p56, %p57
      %p59 = scmp.ne.s32.totalorder %s48, %s49
      %p60 = scmp.eq.s32.totalorder %s26, 0
      %p61 = por %p59, %p60
      %p62 = scmp.ne.s32.totalorder %s48, %s49
      %p63 = scmp.eq.s32.totalorder %s27, 1
      %p64 = por %p62, %p63
      %p66 = scmp.ne.s32.totalorder %s49, %s65
      %p67 = scmp.eq.s32.totalorder %s27, 0
      %p68 = por %p66, %p67
      %s69 = ssub.s32 %s28, %s40
      %p70 = scmp.eq.s32.totalorder %s69, 0
      %s72 = sadd.s32 %s71, 1
      %s73 = scalar_select %p70, %s71, %s72
      %p76 = pneg %p70
      %p77 = scmp.eq.s32.totalorder %s21, 1
      %p78 = por %p76, %p77
      %p79 = scmp.ne.s32.totalorder %s71, %s74
      %p80 = scmp.eq.s32.totalorder %s21, 0
      %p81 = por %p79, %p80
      %p82 = scmp.ne.s32.totalorder %s71, %s74
      %p83 = scmp.eq.s32.totalorder %s26, 1
      %p84 = por %p82, %p83
      %p85 = scmp.ne.s32.totalorder %s74, %s75
      %p86 = scmp.eq.s32.totalorder %s26, 0
      %p87 = por %p85, %p86
      %p88 = scmp.ne.s32.totalorder %s74, %s75
      %p89 = scmp.eq.s32.totalorder %s27, 1
      %p90 = por %p88, %p89
      %p92 = scmp.ne.s32.totalorder %s75, %s91
      %p93 = scmp.eq.s32.totalorder %s27, 0
      %p94 = por %p92, %p93
      %s95 = ssub.s32 %s28, %s40
      %p96 = scmp.eq.s32.totalorder %s95, 0
      %s98 = sadd.s32 %s97, 1
      %s99 = scalar_select %p96, %s97, %s98
      %p102 = pneg %p96
      %p103 = scmp.eq.s32.totalorder %s21, 1
      %p104 = por %p102, %p103
      %p105 = scmp.ne.s32.totalorder %s97, %s100
      %p106 = scmp.eq.s32.totalorder %s21, 0
      %p107 = por %p105, %p106
      %p108 = scmp.ne.s32.totalorder %s97, %s100
      %p109 = scmp.eq.s32.totalorder %s26, 1
      %p110 = por %p108, %p109
      %p111 = scmp.ne.s32.totalorder %s100, %s101
      %p112 = scmp.eq.s32.totalorder %s26, 0
      %p113 = por %p111, %p112
      %p114 = scmp.ne.s32.totalorder %s100, %s101
      %p115 = scmp.eq.s32.totalorder %s27, 1
      %p116 = por %p114, %p115
      %p118 = scmp.ne.s32.totalorder %s101, %s117
      %p119 = scmp.eq.s32.totalorder %s27, 0
      %p120 = por %p118, %p119
      %s121 = ssub.s32 %s28, %s40
      %p122 = scmp.eq.s32.totalorder %s121, 0
      %s124 = sadd.s32 %s123, 1
      %s125 = scalar_select %p122, %s123, %s124
      %p128 = pneg %p122
      %p129 = scmp.eq.s32.totalorder %s21, 1
      %p130 = por %p128, %p129
      %p131 = scmp.ne.s32.totalorder %s123, %s126
      %p132 = scmp.eq.s32.totalorder %s21, 0
      %p133 = por %p131, %p132
      %p134 = scmp.ne.s32.totalorder %s123, %s126
      %p135 = scmp.eq.s32.totalorder %s26, 1
      %p136 = por %p134, %p135
      %p137 = scmp.ne.s32.totalorder %s126, %s127
      %p138 = scmp.eq.s32.totalorder %s26, 0
      %p139 = por %p137, %p138
      %p140 = scmp.ne.s32.totalorder %s126, %s127
      %p141 = scmp.eq.s32.totalorder %s27, 1
      %p142 = por %p140, %p141
      %p144 = scmp.ne.s32.totalorder %s127, %s143
      %p145 = scmp.eq.s32.totalorder %s27, 0
      %p146 = por %p144, %p145
      %s148 = sadd.s32 %s147, 1
      %p151 = scmp.eq.s32.totalorder %s21, 1
      %p152 = scmp.ne.s32.totalorder %s147, %s149
      %p153 = scmp.eq.s32.totalorder %s21, 0
      %p154 = por %p152, %p153
      %p155 = scmp.ne.s32.totalorder %s147, %s149
      %p156 = scmp.eq.s32.totalorder %s26, 1
      %p157 = por %p155, %p156
      %p158 = scmp.ne.s32.totalorder %s149, %s150
      %p159 = scmp.eq.s32.totalorder %s26, 0
      %p160 = por %p158, %p159
      %p161 = scmp.ne.s32.totalorder %s149, %s150
      %p162 = scmp.eq.s32.totalorder %s27, 1
      %p163 = por %p161, %p162
      %p165 = scmp.ne.s32.totalorder %s150, %s164
      %p166 = scmp.eq.s32.totalorder %s27, 0
      %p167 = por %p165, %p166
      %s169 = sadd.s32 %s168, 1
      %p172 = scmp.eq.s32.totalorder %s21, 1
      %p173 = scmp.ne.s32.totalorder %s168, %s170
      %p174 = scmp.eq.s32.totalorder %s21, 0
      %p175 = por %p173, %p174
      %p176 = scmp.ne.s32.totalorder %s168, %s170
      %p177 = scmp.eq.s32.totalorder %s26, 1
      %p178 = por %p176, %p177
      %p179 = scmp.ne.s32.totalorder %s170, %s171
      %p180 = scmp.eq.s32.totalorder %s26, 0
      %p181 = por %p179, %p180
      %p182 = scmp.ne.s32.totalorder %s170, %s171
      %p183 = scmp.eq.s32.totalorder %s27, 1
      %p184 = por %p182, %p183
      %p186 = scmp.ne.s32.totalorder %s171, %s185
      %p187 = scmp.eq.s32.totalorder %s27, 0
      %p188 = por %p186, %p187
      %s190 = sadd.s32 %s189, 1
      %p193 = scmp.eq.s32.totalorder %s21, 1
      %p194 = scmp.ne.s32.totalorder %s189, %s191
      %p195 = scmp.eq.s32.totalorder %s21, 0
      %p196 = por %p194, %p195
      %p197 = scmp.ne.s32.totalorder %s189, %s191
      %p198 = scmp.eq.s32.totalorder %s26, 1
      %p199 = por %p197, %p198
      %p200 = scmp.ne.s32.totalorder %s191, %s192
      %p201 = scmp.eq.s32.totalorder %s26, 0
      %p202 = por %p200, %p201
      %p203 = scmp.ne.s32.totalorder %s191, %s192
      %p204 = scmp.eq.s32.totalorder %s27, 1
      %p205 = por %p203, %p204
      %p207 = scmp.ne.s32.totalorder %s192, %s206
      %p208 = scmp.eq.s32.totalorder %s27, 0
      %p209 = por %p207, %p208
      %s211 = sadd.s32 %s210, 1
      %p214 = scmp.eq.s32.totalorder %s21, 1
      %p215 = scmp.ne.s32.totalorder %s210, %s212
      %p216 = scmp.eq.s32.totalorder %s21, 0
      %p217 = por %p215, %p216
      %p218 = scmp.ne.s32.totalorder %s210, %s212
      %p219 = scmp.eq.s32.totalorder %s26, 1
      %p220 = por %p218, %p219
      %p221 = scmp.ne.s32.totalorder %s212, %s213
      %p222 = scmp.eq.s32.totalorder %s26, 0
      %p223 = por %p221, %p222
      %p224 = scmp.ne.s32.totalorder %s212, %s213
      %p225 = scmp.eq.s32.totalorder %s27, 1
      %p226 = por %p224, %p225
      %p228 = scmp.ne.s32.totalorder %s213, %s227
      %p229 = scmp.eq.s32.totalorder %s27, 0
      %p230 = por %p228, %p229
      %s232 = sadd.s32 %s231, 1
      %p235 = scmp.eq.s32.totalorder %s21, 1
      %p236 = scmp.ne.s32.totalorder %s231, %s233
      %p237 = scmp.eq.s32.totalorder %s21, 0
      %p238 = por %p236, %p237
      %p239 = scmp.ne.s32.totalorder %s231, %s233
      %p240 = scmp.eq.s32.totalorder %s26, 1
      %p241 = por %p239, %p240
      %p242 = scmp.ne.s32.totalorder %s233, %s234
      %p243 = scmp.eq.s32.totalorder %s26, 0
      %p244 = por %p242, %p243
      %p245 = scmp.ne.s32.totalorder %s233, %s234
      %p246 = scmp.eq.s32.totalorder %s27, 1
      %p247 = por %p245, %p246
      %p249 = scmp.ne.s32.totalorder %s234, %s248
      %p250 = scmp.eq.s32.totalorder %s27, 0
      %p251 = por %p249, %p250
      %s253 = sadd.s32 %s252, 1
      %p256 = scmp.eq.s32.totalorder %s21, 1
      %p257 = scmp.ne.s32.totalorder %s252, %s254
      %p258 = scmp.eq.s32.totalorder %s21, 0
      %p259 = por %p257, %p258
      %p260 = scmp.ne.s32.totalorder %s252, %s254
      %p261 = scmp.eq.s32.totalorder %s26, 1
      %p262 = por %p260, %p261
      %p263 = scmp.ne.s32.totalorder %s254, %s255
      %p264 = scmp.eq.s32.totalorder %s26, 0
      %p265 = por %p263, %p264
      %p266 = scmp.ne.s32.totalorder %s254, %s255
      %p267 = scmp.eq.s32.totalorder %s27, 1
      %p268 = por %p266, %p267
      %p270 = scmp.ne.s32.totalorder %s255, %s269
      %p271 = scmp.eq.s32.totalorder %s27, 0
      %p272 = por %p270, %p271
      %s273 = ssub.s32 %s28, %s40
      %s274 = ssub.s32 %s29, %s36
      %s275 = sor.u32 %s273, %s274
      %p276 = scmp.eq.s32.totalorder %s275, 0
      %s278 = sadd.s32 %s277, 1
      %s279 = scalar_select %p276, %s277, %s278
      %p282 = pneg %p276
      %p283 = scmp.eq.s32.totalorder %s21, 1
      %p284 = por %p282, %p283
      %p285 = scmp.ne.s32.totalorder %s277, %s280
      %p286 = scmp.eq.s32.totalorder %s21, 0
      %p287 = por %p285, %p286
      %p288 = scmp.ne.s32.totalorder %s277, %s280
      %p289 = scmp.eq.s32.totalorder %s26, 1
      %p290 = por %p288, %p289
      %p291 = scmp.ne.s32.totalorder %s280, %s281
      %p292 = scmp.eq.s32.totalorder %s26, 0
      %p293 = por %p291, %p292
      %p294 = scmp.ne.s32.totalorder %s280, %s281
      %p295 = scmp.eq.s32.totalorder %s27, 1
      %p296 = por %p294, %p295
      %p298 = scmp.ne.s32.totalorder %s281, %s297
      %p299 = scmp.eq.s32.totalorder %s27, 0
      %p300 = por %p298, %p299
      %p301 = scmp.le.s32.totalorder 1, %s21
      %p302 = scmp.lt.s32.totalorder %s21, 3
      %p303 = pnand %p301, %p302
      %p304 = pneg %p303
      // Predicated region
      $region9: #{tpu_custom_call.1} parent=5 // pred_check
        _
      $region10: #{tpu_custom_call.1} parent=5 // pred_check_branch
        %306 = sbr.rel (%p303) target = $region12
      $region11: #{tpu_custom_call.1} parent=5 // pred_region
        %s307 = ssub.s32 %s21, 1
        // Predicated region
        $region13: #{tpu_custom_call.1} parent=11 // pred_check
          %p308 = pneg %p160
        $region14: #{tpu_custom_call.1} parent=11 // pred_check_branch
          %310 = sbr.rel (%p308) target = $region16
        $region15: #{tpu_custom_call.1} parent=11 // pred_region
          _
        $region16: #{tpu_custom_call.1} parent=11 // pred_fallthru
          _
        // Predicated region
        $region17: #{tpu_custom_call.1} parent=11 // pred_check
          %p311 = pneg %p181
        $region18: #{tpu_custom_call.1} parent=11 // pred_check_branch
          %313 = sbr.rel (%p311) target = $region20
        $region19: #{tpu_custom_call.1} parent=11 // pred_region
          _
        $region20: #{tpu_custom_call.1} parent=11 // pred_fallthru
          _
        // Predicated region
        $region21: #{tpu_custom_call.1} parent=11 // pred_check
          %p314 = pneg %p202
        $region22: #{tpu_custom_call.1} parent=11 // pred_check_branch
          %316 = sbr.rel (%p314) target = $region24
        $region23: #{tpu_custom_call.1} parent=11 // pred_region
          %318 = vsyncadd [#allocation5], 0
          %s319 = sshll.u32 %s6, 4
          %s320 = int_to_ptr.hbm [resolvable:$true] %s319
          %s321 = sshll.u32 [#allocation4], 4
          %s322 = int_to_ptr.vmem [resolvable:$true] %s321
          %327 = dma.hbm_to_vmem [thread:$0]  %s320, 256, %s322, [#allocation5], 128, 128, 8
        $region24: #{tpu_custom_call.1} parent=11 // pred_fallthru
          _
        // Predicated region
        $region25: #{tpu_custom_call.1} parent=11 // pred_check
          %p328 = pneg %p223
        $region26: #{tpu_custom_call.1} parent=11 // pred_check_branch
          %330 = sbr.rel (%p328) target = $region28
        $region27: #{tpu_custom_call.1} parent=11 // pred_region
          _
        $region28: #{tpu_custom_call.1} parent=11 // pred_fallthru
          _
        // Predicated region
        $region29: #{tpu_custom_call.1} parent=11 // pred_check
          %p331 = pneg %p244
        $region30: #{tpu_custom_call.1} parent=11 // pred_check_branch
          %333 = sbr.rel (%p331) target = $region32
        $region31: #{tpu_custom_call.1} parent=11 // pred_region
          %335 = vsyncadd [#allocation8], 0
          %s336 = sshll.u32 %s8, 4
          %s337 = int_to_ptr.hbm [resolvable:$true] %s336
          %s338 = sshll.u32 [#allocation7], 4
          %s339 = int_to_ptr.vmem [resolvable:$true] %s338
          %344 = dma.hbm_to_vmem [thread:$0]  %s337, 128, %s339, [#allocation8], 64, 64, 4
        $region32: #{tpu_custom_call.1} parent=11 // pred_fallthru
          _
        // Predicated region
        $region33: #{tpu_custom_call.1} parent=11 // pred_check
          %p345 = pneg %p265
        $region34: #{tpu_custom_call.1} parent=11 // pred_check_branch
          %347 = sbr.rel (%p345) target = $region36
        $region35: #{tpu_custom_call.1} parent=11 // pred_region
          _
        $region36: #{tpu_custom_call.1} parent=11 // pred_fallthru
          _
      $region12: #{tpu_custom_call.1} parent=5 // pred_fallthru
        _
      %p348 = scmp.lt.s32.totalorder %s21, 2
      // Predicated region
      $region37: #{tpu_custom_call.1} parent=5 // pred_check
        %p349 = pneg %p348
      $region38: #{tpu_custom_call.1} parent=5 // pred_check_branch
        %351 = sbr.rel (%p349) target = $region40
      $region39: #{tpu_custom_call.1} parent=5 // pred_region
        // Predicated region
        $region41: #{tpu_custom_call.1} parent=39 // pred_check
          %p352 = pneg %p55
        $region42: #{tpu_custom_call.1} parent=39 // pred_check_branch
          %354 = sbr.rel (%p352) target = $region44
        $region43: #{tpu_custom_call.1} parent=39 // pred_region
          %p355 = scmp.lt.s32.totalorder %s28, 1
          %s356 = scalar_select %p355, %s28, 1
          %p357 = scmp.lt.s32.totalorder %s29, 0
          %s358 = scalar_select %p357, %s29, 0
          %s359 = sadd.s32 %s358, %s356
          %s360 = smul.addr %s359, 8
          %s361 = scalar_lea.vmem %s0, %s360
        $region44: #{tpu_custom_call.1} parent=39 // pred_fallthru
          _
        // Predicated region
        $region45: #{tpu_custom_call.1} parent=39 // pred_check
          %p362 = pneg %p81
        $region46: #{tpu_custom_call.1} parent=39 // pred_check_branch
          %364 = sbr.rel (%p362) target = $region48
        $region47: #{tpu_custom_call.1} parent=39 // pred_region
          %p365 = scmp.lt.s32.totalorder %s28, 1
          %s366 = scalar_select %p365, %s28, 1
          %s367 = smul.addr %s366, 8
          %s368 = scalar_lea.vmem %s1, %s367
        $region48: #{tpu_custom_call.1} parent=39 // pred_fallthru
          _
        // Predicated region
        $region49: #{tpu_custom_call.1} parent=39 // pred_check
          %p369 = pneg %p107
        $region50: #{tpu_custom_call.1} parent=39 // pred_check_branch
          %371 = sbr.rel (%p369) target = $region52
        $region51: #{tpu_custom_call.1} parent=39 // pred_region
          %p372 = scmp.lt.s32.totalorder %s28, 1
          %s373 = scalar_select %p372, %s28, 1
          %s374 = smul.addr %s373, 8
          %s375 = scalar_lea.vmem %s2, %s374
        $region52: #{tpu_custom_call.1} parent=39 // pred_fallthru
          _
        // Predicated region
        $region53: #{tpu_custom_call.1} parent=39 // pred_check
          %p376 = pneg %p133
        $region54: #{tpu_custom_call.1} parent=39 // pred_check_branch
          %378 = sbr.rel (%p376) target = $region56
        $region55: #{tpu_custom_call.1} parent=39 // pred_region
          %p379 = scmp.lt.s32.totalorder %s28, 1
          %s380 = scalar_select %p379, %s28, 1
          %s381 = smul.addr %s380, 8
          %s382 = scalar_lea.vmem %s3, %s381
        $region56: #{tpu_custom_call.1} parent=39 // pred_fallthru
          _
      $region40: #{tpu_custom_call.1} parent=5 // pred_fallthru
        _
      %p383 = scmp.le.s32.totalorder 1, %s21
      %p384 = scmp.lt.s32.totalorder %s21, 3
      %p385 = pnand %p383, %p384
      %p386 = pneg %p385
      // Predicated region
      $region57: #{tpu_custom_call.1} parent=5 // pred_check
        _
      $region58: #{tpu_custom_call.1} parent=5 // pred_check_branch
        %388 = sbr.rel (%p385) target = $region60
      $region59: #{tpu_custom_call.1} parent=5 // pred_region
        %s389 = ssub.s32 %s21, 1
        // Predicated region
        $region61: #{tpu_custom_call.1} parent=59 // pred_check
          %p390 = pneg %p202
        $region62: #{tpu_custom_call.1} parent=59 // pred_check_branch
          %392 = sbr.rel (%p390) target = $region64
        $region63: #{tpu_custom_call.1} parent=59 // pred_region
          %394 = dma.done [#allocation5], 256
        $region64: #{tpu_custom_call.1} parent=59 // pred_fallthru
          _
        // Predicated region
        $region65: #{tpu_custom_call.1} parent=59 // pred_check
          %p395 = pneg %p244
        $region66: #{tpu_custom_call.1} parent=59 // pred_check_branch
          %397 = sbr.rel (%p395) target = $region68
        $region67: #{tpu_custom_call.1} parent=59 // pred_region
          %399 = dma.done [#allocation8], 128
        $region68: #{tpu_custom_call.1} parent=59 // pred_fallthru
          _
        %p400 = scmp.lt.s32.totalorder %s30, 1
        %s401 = scalar_select %p400, %s30, 1
        %p402 = scmp.lt.s32.totalorder %s31, 0
        %s403 = scalar_select %p402, %s31, 0
        %s404 = sadd.s32 %s403, %s401
        %s405 = smul.addr %s404, 8
        %s406 = scalar_lea.vmem %s0, %s405
        %p407 = pneg %p61
        %p408 = pneg %p58
        %p409 = scmp.lt.s32.totalorder %s30, 1
        %s410 = scalar_select %p409, %s30, 1
        %s411 = smul.addr %s410, 8
        %s412 = scalar_lea.vmem %s1, %s411
        %p413 = pneg %p87
        %p414 = pneg %p84
        %p415 = scmp.lt.s32.totalorder %s30, 1
        %s416 = scalar_select %p415, %s30, 1
        %s417 = smul.addr %s416, 8
        %s418 = scalar_lea.vmem %s2, %s417
        %p419 = pneg %p113
        %p420 = pneg %p110
        %p421 = scmp.lt.s32.totalorder %s30, 1
        %s422 = scalar_select %p421, %s30, 1
        %s423 = smul.addr %s422, 8
        %s424 = scalar_lea.vmem %s3, %s423
        %p425 = pneg %p139
        %p426 = pneg %p136
        %p427 = pneg %p160
        %p428 = pneg %p157
        %p429 = pneg %p181
        %p430 = pneg %p178
        %p431 = pneg %p202
        %p432 = pneg %p199
        %p433 = pneg %p223
        %p434 = pneg %p220
        %p435 = pneg %p244
        %p436 = pneg %p241
        %p437 = pneg %p265
        %p438 = pneg %p262
        %p439 = pneg %p293
        %p440 = pneg %p290
        %s441 = sand.u32 %s280, 1
        %s442 = scalar_lea.sflag [#allocation6], %s441
        %s443 = sand.u32 %s280, 1
        %s444 = smul.addr %s443, 8
        %s445 = scalar_lea.vmem [#allocation9], %s444
        %p446 = scmp.lt.s32.totalorder %s30, 1
        %s447 = scalar_select %p446, %s30, 1
        %p448 = scmp.lt.s32.totalorder %s31, 0
        %s449 = scalar_select %p448, %s31, 0
        %s450 = sadd.s32 %s449, %s447
        %s451 = smul.addr %s450, 8
        %s452 = scalar_lea.vmem %s0, %s451
        %p453 = scmp.lt.s32.totalorder %s30, 1
        %s454 = scalar_select %p453, %s30, 1
        %s455 = smul.addr %s454, 8
        %s456 = scalar_lea.vmem %s1, %s455
        %p457 = scmp.lt.s32.totalorder %s30, 1
        %s458 = scalar_select %p457, %s30, 1
        %s459 = smul.addr %s458, 8
        %s460 = scalar_lea.vmem %s2, %s459
        %p461 = scmp.lt.s32.totalorder %s30, 1
        %s462 = scalar_select %p461, %s30, 1
        %s463 = smul.addr %s462, 8
        %s464 = scalar_lea.vmem %s3, %s463
        %v465 = vld [vmem:[%s452] sm:$0xff]
        %v466 = vld [vmem:[%s456] sm:$0xff]
        %v467 = vld [vmem:[%s4] sm:$0xff]
        %v468 = vld [vmem:[%s4 + $0x8] sm:$0xff]
        %v469 = vld [vmem:[%s5] sm:$0x1]
        %v471 = vperm.slane %v469, 0
        %vm473 = vcmask 130048
        %v475 = vsel %vm473, %v465, 0
        %477 = vmatpush.msra.mxu0 0.0
        %478 = vmatpush.msra.mxu0 0.0
        %479 = vmatpush.msra.mxu0 0.0
        %480 = vmatpush.msra.mxu0 0.0
        %481 = vmatpush.msra.mxu0 0.0
        %482 = vmatpush.msra.mxu0 0.0
        %483 = vmatpush.msra.mxu0 0.0
        %484 = vmatpush.msra.mxu0 0.0
        %485 = vmatpush.msra.mxu0 0.0
        %486 = vmatpush.msra.mxu0 0.0
        %487 = vmatpush.msra.mxu0 0.0
        %488 = vmatpush.msra.mxu0 0.0
        %489 = vmatpush.msra.mxu0 0.0
        %490 = vmatpush.msra.mxu0 0.0
        %491 = vmatpush.msra.mxu0 %v468
        %492 = vmatpush.msra.mxu0 %v467
        %493 = vmatmul.f32.gmra.mxu0 %v475
        %v494 = vpop.f32.mrf.mxu0
        %v495 = vadd.f32 %v471, %v494
        %496 = vdwg.mxu0
        %497 = vst.msk [vmem:[#allocation2] sm:$0xff] %vm473, %v495
        %v498 = vld [vmem:[#allocation4] sm:$0xff]
        %v499 = vld [vmem:[#allocation4 + $0x8] sm:$0xff]
        %v500 = vld [vmem:[%s7] sm:$0x1]
        %v502 = vperm.slane %v500, 0
        %v505 = vsel %vm473, %v466, 0
        %507 = vmatpush.msra.mxu0 0.0
        %508 = vmatpush.msra.mxu0 0.0
        %509 = vmatpush.msra.mxu0 0.0
        %510 = vmatpush.msra.mxu0 0.0
        %511 = vmatpush.msra.mxu0 0.0
        %512 = vmatpush.msra.mxu0 0.0
        %513 = vmatpush.msra.mxu0 0.0
        %514 = vmatpush.msra.mxu0 0.0
        %515 = vmatpush.msra.mxu0 0.0
        %516 = vmatpush.msra.mxu0 0.0
        %517 = vmatpush.msra.mxu0 0.0
        %518 = vmatpush.msra.mxu0 0.0
        %519 = vmatpush.msra.mxu0 0.0
        %520 = vmatpush.msra.mxu0 0.0
        %521 = vmatpush.msra.mxu0 %v499
        %522 = vmatpush.msra.mxu0 %v498
        %523 = vmatmul.f32.gmra.mxu0 %v505
        %v524 = vpop.f32.mrf.mxu0
        %v525 = vadd.f32 %v502, %v524
        %526 = vdwg.mxu0
        %527 = vst.msk [vmem:[#allocation3] sm:$0xff] %vm473, %v525
        %v528 = vld [vmem:[%s460] sm:$0xff]
        %v529 = vld [vmem:[%s464] sm:$0xff]
        %v530 = vmul.f32 %v529, %v528
        %532 = vrot.lane.b32.xlu0 %v529, 4
        %v533 = vpop.permute.xlu0 %532
        %vm535 = vcmask 31744
        %v536 = vsel %vm535, %v530, %v533
        %v537 = vsel %vm535, %v528, 0.0
        %v538 = vrot.slane %v537, 4
        %v539 = vadd.f32 %v537, %v538
        %v540 = vrot.slane %v539, 2
        %v541 = vadd.f32 %v539, %v540
        %v542 = vrot.slane %v541, 1
        %v543 = vadd.f32 %v541, %v542
        %v544 = vmul.f32 %v543, 0.125
        %v545 = vld [vmem:[#allocation2] sm:$0xff]
        %v546 = vld [vmem:[#allocation3] sm:$0xff]
        %vm547 = vcmask 64512
        %v549 = vsel %vm547, %v545, 0
        %v552 = vsel %vm547, %v546, 0
        %554 = vmatpush.xpose.msra.mxu0 0.0
        %555 = vmatpush.xpose.msra.mxu0 0.0
        %556 = vmatpush.xpose.msra.mxu0 0.0
        %557 = vmatpush.xpose.msra.mxu0 0.0
        %558 = vmatpush.xpose.msra.mxu0 0.0
        %559 = vmatpush.xpose.msra.mxu0 0.0
        %560 = vmatpush.xpose.msra.mxu0 0.0
        %561 = vmatpush.xpose.msra.mxu0 0.0
        %562 = vmatpush.xpose.msra.mxu0 0.0
        %563 = vmatpush.xpose.msra.mxu0 0.0
        %564 = vmatpush.xpose.msra.mxu0 0.0
        %565 = vmatpush.xpose.msra.mxu0 0.0
        %566 = vmatpush.xpose.msra.mxu0 0.0
        %567 = vmatpush.xpose.msra.mxu0 0.0
        %568 = vmatpush.xpose.msra.mxu0 0.0
        %569 = vmatpush.xpose.msra.mxu0 %v552
        %570 = vmatmul.f32.gmra.mxu0 %v549
        %v571 = vpop.f32.mrf.mxu0
        %v572 = vadd.f32 0.0, %v571
        %573 = vdwg.mxu0
        %574 = vrot.lane.b32.xlu0 %v545, 120
        %v575 = vpop.permute.xlu0 %574
        %576 = vrot.lane.b32.xlu0 %v546, 120
        %v577 = vpop.permute.xlu0 %576
        %v578 = vsel %vm547, %v575, 0
        %v580 = vsel %vm547, %v577, 0
        %582 = vmatpush.xpose.msra.mxu0 0.0
        %583 = vmatpush.xpose.msra.mxu0 0.0
        %584 = vmatpush.xpose.msra.mxu0 0.0
        %585 = vmatpush.xpose.msra.mxu0 0.0
        %586 = vmatpush.xpose.msra.mxu0 0.0
        %587 = vmatpush.xpose.msra.mxu0 0.0
        %588 = vmatpush.xpose.msra.mxu0 0.0
        %589 = vmatpush.xpose.msra.mxu0 0.0
        %590 = vmatpush.xpose.msra.mxu0 0.0
        %591 = vmatpush.xpose.msra.mxu0 0.0
        %592 = vmatpush.xpose.msra.mxu0 0.0
        %593 = vmatpush.xpose.msra.mxu0 0.0
        %594 = vmatpush.xpose.msra.mxu0 0.0
        %595 = vmatpush.xpose.msra.mxu0 0.0
        %596 = vmatpush.xpose.msra.mxu0 0.0
        %597 = vmatpush.xpose.msra.mxu0 %v580
        %598 = vmatmul.f32.gmra.mxu0 %v578
        %v599 = vpop.f32.mrf.mxu0
        %v600 = vadd.f32 0.0, %v599
        %601 = vdwg.mxu0
        %v602 = vsel %vm547, %v572, -inf
        %603 = vmax.xlane.f32.xlu0 %v602
        %v604 = vpop.xlane.xlu0 %603
        %v605 = vsel %vm547, %v600, -inf
        %606 = vmax.xlane.f32.xlu0 %v605
        %v607 = vpop.xlane.xlu0 %606
        %v608 = vsub.f32 %v572, %v604
        %v609 = vsub.f32 %v600, %v607
        %v610 = vmul.f32 %v608, 1.442695
        %v611 = vpow.pop %v610
        %v612 = vmul.f32 %v609, 1.442695
        %v613 = vpow.pop %v612
        %v615 = vsel %vm547, %v611, 0
        %v618 = vsel %vm547, %v613, 0
        %620 = vmatpush.msra.mxu0 0.0
        %621 = vmatpush.msra.mxu0 0.0
        %622 = vmatpush.msra.mxu0 0.0
        %623 = vmatpush.msra.mxu0 0.0
        %624 = vmatpush.msra.mxu0 0.0
        %625 = vmatpush.msra.mxu0 0.0
        %626 = vmatpush.msra.mxu0 0.0
        %627 = vmatpush.msra.mxu0 0.0
        %628 = vmatpush.msra.mxu0 0.0
        %629 = vmatpush.msra.mxu0 0.0
        %630 = vmatpush.msra.mxu0 0.0
        %631 = vmatpush.msra.mxu0 0.0
        %632 = vmatpush.msra.mxu0 0.0
        %633 = vmatpush.msra.mxu0 0.0
        %634 = vmatpush.msra.mxu0 0.0
        %635 = vmatpush.msra.mxu0 %v536
        %636 = vmatmul.f32.gmra.mxu0 %v615
        %v637 = vpop.f32.mrf.mxu0
        %v638 = vadd.f32 0.0, %v637
        %639 = vmatmul.f32.gmra.mxu0 %v618
        %v640 = vpop.f32.mrf.mxu0
        %v641 = vadd.f32 0.0, %v640
        %642 = vdwg.mxu0
        %v643 = vmax.f32 %v638, 1e-30
        %v644 = vmax.f32 %v641, 1e-30
        %v645 = vrcp.pop %v643
        %v646 = vmul.f32 %v643, %v645
        %v647 = vsub.f32 1.0, %v646
        %v648 = vmul.f32 %v645, %v647
        %v649 = vadd.f32 %v645, %v648
        %vm650 = vweird.f32 %v643
        %vm651 = vweird.f32 %v645
        %vm652 = vmor %vm650, %vm651
        %v653 = vsel %vm652, %v645, %v649
        %v654 = vand.u32 2147483647, %v643
        %vm655 = vcmp.eq.f32.partialorder %v654, 8.507059e+37
        %v656 = vand.u32 %v643, 2147483648
        %v657 = vor.u32 1.1754944e-38, %v656
        %v658 = vsel %vm655, %v657, %v653
        %v659 = vrcp.pop %v644
        %v660 = vmul.f32 %v644, %v659
        %v661 = vsub.f32 1.0, %v660
        %v662 = vmul.f32 %v659, %v661
        %v663 = vadd.f32 %v659, %v662
        %vm664 = vweird.f32 %v644
        %vm665 = vweird.f32 %v659
        %vm666 = vmor %vm664, %vm665
        %v667 = vsel %vm666, %v659, %v663
        %v668 = vand.u32 2147483647, %v644
        %vm669 = vcmp.eq.f32.partialorder %v668, 8.507059e+37
        %v670 = vand.u32 %v644, 2147483648
        %v671 = vor.u32 1.1754944e-38, %v670
        %v672 = vsel %vm669, %v671, %v667
        %vm673 = vcmp.gt.f32.partialorder %v638, 0.0
        %vm674 = vcmp.gt.f32.partialorder %v641, 0.0
        %677 = vrot.lane.b32.xlu0 %v658, 124
        %v678 = vpop.permute.xlu0 %677
        %679 = vrot.lane.b32.xlu0 %v672, 124
        %v680 = vpop.permute.xlu0 %679
        %v683 = vmul.f32 %v638, %v678
        %v684 = vmul.f32 %v641, %v680
        %687 = vrot.lane.b32.xlu0 %v683, 4
        %v688 = vpop.permute.xlu0 %687
        %689 = vrot.lane.b32.xlu0 %v684, 4
        %v690 = vpop.permute.xlu0 %689
        %694 = vrot.lane.b32.xlu0 %v544, 4
        %v695 = vpop.permute.xlu0 %694
        %v697 = vsel %vm673, %v688, %v695
        %v698 = vsel %vm674, %v690, %v695
        %v699 = vld [vmem:[#allocation7] sm:$0xf]
        %s700 = scalar_lea.vmem [#allocation7], 4
        %v701 = vld [vmem:[%s700] sm:$0xf]
        %703 = vrot.lane.b32.xlu0 %v698, 124
        %v704 = vpop.permute.xlu0 %703
        %v705 = vsel %vm535, %v704, 0
        %vm707 = vcmask 1043456
        %v709 = vsel %vm707, %v701, 0
        %711 = vmatpush.msra.mxu0 0.0
        %712 = vmatpush.msra.mxu0 0.0
        %713 = vmatpush.msra.mxu0 0.0
        %714 = vmatpush.msra.mxu0 0.0
        %715 = vmatpush.msra.mxu0 0.0
        %716 = vmatpush.msra.mxu0 0.0
        %717 = vmatpush.msra.mxu0 0.0
        %718 = vmatpush.msra.mxu0 0.0
        %719 = vmatpush.msra.mxu0 0.0
        %720 = vmatpush.msra.mxu0 0.0
        %721 = vmatpush.msra.mxu0 0.0
        %722 = vmatpush.msra.mxu0 0.0
        %723 = vmatpush.msra.mxu0 0.0
        %724 = vmatpush.msra.mxu0 0.0
        %725 = vmatpush.msra.mxu0 0.0
        %726 = vmatpush.msra.mxu0 %v709
        %727 = vmatmul.f32.gmra.mxu0 %v705
        %v728 = vpop.f32.mrf.mxu0
        %v729 = vadd.f32 0.0, %v728
        %730 = vdwg.mxu0
        %732 = vrot.lane.b32.xlu0 %v697, 124
        %v733 = vpop.permute.xlu0 %732
        %v734 = vsel %vm535, %v733, 0
        %v737 = vsel %vm707, %v699, 0
        %739 = vmatpush.msra.mxu0 0.0
        %740 = vmatpush.msra.mxu0 0.0
        %741 = vmatpush.msra.mxu0 0.0
        %742 = vmatpush.msra.mxu0 0.0
        %743 = vmatpush.msra.mxu0 0.0
        %744 = vmatpush.msra.mxu0 0.0
        %745 = vmatpush.msra.mxu0 0.0
        %746 = vmatpush.msra.mxu0 0.0
        %747 = vmatpush.msra.mxu0 0.0
        %748 = vmatpush.msra.mxu0 0.0
        %749 = vmatpush.msra.mxu0 0.0
        %750 = vmatpush.msra.mxu0 0.0
        %751 = vmatpush.msra.mxu0 0.0
        %752 = vmatpush.msra.mxu0 0.0
        %753 = vmatpush.msra.mxu0 0.0
        %754 = vmatpush.msra.mxu0 %v737
        %755 = vmatmul.f32.gmra.mxu0 %v734
        %v756 = vpop.f32.mrf.mxu0
        %v757 = vadd.f32 %v729, %v756
        %758 = vdwg.mxu0
        %v759 = vld [vmem:[%s9] sm:$0x1]
        %v761 = vperm.slane %v759, 0
        %v763 = vadd.f32 %v757, %v761
        %764 = vst.msk [vmem:[%s445] sm:$0xff] %vm473, %v763
        %s765 = sand.u32 %s280, 1
        %s766 = scalar_lea.sflag [#allocation6], %s765
        %s767 = sand.u32 %s280, 1
        %s768 = smul.addr %s767, 8
        %s769 = scalar_lea.vmem [#allocation9], %s768
        // Predicated region
        $region69: #{tpu_custom_call.1} parent=59 // pred_check
          %p770 = pneg %p290
        $region70: #{tpu_custom_call.1} parent=59 // pred_check_branch
          %772 = sbr.rel (%p770) target = $region72
        $region71: #{tpu_custom_call.1} parent=59 // pred_region
          %774 = vsyncadd %s766, 0
          %s775 = sadd.s32 %s31, %s30
          %s776 = smul.addr %s775, 8
          %s777 = scalar_lea.hbm %s10, %s776
          %s779 = sshll.u32 %s769, 4
          %s780 = int_to_ptr.vmem [resolvable:$true] %s779
          %s781 = sshll.u32 %s777, 4
          %s782 = int_to_ptr.hbm [resolvable:$true] %s781
          %784 = dma.vmem_to_hbm [thread:$0]  %s780, 128, %s782, %s766
        $region72: #{tpu_custom_call.1} parent=59 // pred_fallthru
          _
      $region60: #{tpu_custom_call.1} parent=5 // pred_fallthru
        _
      %p785 = scmp.le.s32.totalorder 2, %s21
      // Predicated region
      $region73: #{tpu_custom_call.1} parent=5 // pred_check
        %p786 = pneg %p785
      $region74: #{tpu_custom_call.1} parent=5 // pred_check_branch
        %788 = sbr.rel (%p786) target = $region76
      $region75: #{tpu_custom_call.1} parent=5 // pred_region
        %s789 = ssub.s32 %s21, 2
        // Predicated region
        $region77: #{tpu_custom_call.1} parent=75 // pred_check
          %p790 = pneg %p296
        $region78: #{tpu_custom_call.1} parent=75 // pred_check_branch
          %792 = sbr.rel (%p790) target = $region80
        $region79: #{tpu_custom_call.1} parent=75 // pred_region
          %s793 = sand.u32 %s281, 1
          %s794 = scalar_lea.sflag [#allocation6], %s793
          %s795 = sand.u32 %s281, 1
          %s796 = smul.addr %s795, 8
          %s797 = scalar_lea.vmem [#allocation9], %s796
          %799 = dma.done %s794, 128
        $region80: #{tpu_custom_call.1} parent=75 // pred_fallthru
          _
      $region76: #{tpu_custom_call.1} parent=5 // pred_fallthru
        _
    $region6: #{tpu_custom_call.1} parent=1 // loop_footer
      %s25 = sadd.s32 1, %s21
    $region7: #{tpu_custom_call.1} parent=1 // loop_footer_branch
      %20 = sbr.rel target = $region3
    $region8: #{tpu_custom_call.1} parent=1 // loop_exit
      _
    %800 = vsyncpa [#allocation5], 1
    %s801 = scalar_lea.sflag [#allocation5], 1
    %802 = vsyncpa %s801, 1
    %803 = vsyncpa [#allocation8], 1
    %804 = vsyncpa [#allocation6], 1
    %s805 = scalar_lea.sflag [#allocation6], 1
    %806 = vsyncpa %s805, 1

</llo_original>
